<compile_context>
chip_gen: v6e
topology: v6e:2x2x1
jax: 0.10.0
libtpu: 0.0.40
codegen_flags: <defaults>
</compile_context>

<pallas_src>
import jax
import jax.numpy as jnp
from jax import lax
from jax.experimental import pallas as pl
from jax.experimental.pallas import tpu as pltpu


def _round_up(v, m):
    return ((v + m - 1) // m) * m


def _matmul_bn_kernel(p_ref, w_ref, s_ref, o_ref):
    # p_ref: (TP, K)    bf16 im2col rows (one row per output pixel)
    # w_ref: (K, Cout)  bf16 conv weight with BN scale folded in
    # s_ref: (1, Cout)  f32 BN shift
    # o_ref: (TP, Cout) f32
    acc = jnp.dot(p_ref[...], w_ref[...], preferred_element_type=jnp.float32)
    o_ref[...] = acc + s_ref[...]


def firstconv3x3_forward(x, conv_w, gamma, beta, running_mean, running_var,
                         stride, eps=1e-5):
    """Conv2d(inp, oup, 3, stride, padding=1, bias=False) + BatchNorm2d(oup).

    x: (N, Cin, H, W) float32 NCHW; conv_w: (Cout, Cin, 3, 3) OIHW.
    Returns (N, Cout, Ho, Wo) float32.
    """
    # TODO(synk): BatchNorm uses running stats (inference mode); training-mode
    # batch statistics are not computed here.
    N, Cin, H, W = x.shape
    Cout = conv_w.shape[0]
    Ho = (H + 2 - 3) // stride + 1
    Wo = (W + 2 - 3) // stride + 1
    P = Ho * Wo
    K = 9 * Cin

    # ---- fold BN (eval mode) into the conv weight and a per-channel shift ----
    # Fold the scale BEFORE the bf16 cast; keep shift / accumulation in f32.
    inv_std = gamma / jnp.sqrt(running_var + eps)                  # (Cout,)
    shift = (beta - running_mean * inv_std).astype(jnp.float32)[None, :]
    # (Cout, Cin, 3, 3) -> rows in (kh, kw, cin) order, matching the tap order.
    w2d = (jnp.transpose(conv_w, (2, 3, 1, 0)).reshape(K, Cout)
           * inv_std[None, :]).astype(jnp.bfloat16)

    # ---- wrapper-side im2col (bf16, 9*Cin channels: tiny vs. the output) -----
    # TODO(synk): accept NHWC input / emit NHWC output if the surrounding graph
    # allows, to drop the NCHW<->NHWC layout passes below.
    x_nhwc = jnp.transpose(x, (0, 2, 3, 1)).astype(jnp.bfloat16)   # (N,H,W,Cin)
    x_pad = jnp.pad(x_nhwc, ((0, 0), (1, 1), (1, 1), (0, 0)))      # (N,H+2,W+2,Cin)
    taps = []
    for kh in range(3):
        for kw in range(3):
            taps.append(lax.slice(
                x_pad,
                (0, kh, kw, 0),
                (N, kh + (Ho - 1) * stride + 1, kw + (Wo - 1) * stride + 1, Cin),
                (1, stride, stride, 1)))                            # (N,Ho,Wo,Cin)
    patches = jnp.concatenate(taps, axis=-1).reshape(N * P, K)      # (N*P, K)

    # ---- tiling: ~2k output pixels per grid step, rows a multiple of 16 ------
    NP = N * P
    TP_target = 2048
    n_tiles = pl.cdiv(NP, TP_target)
    TP = _round_up(pl.cdiv(NP, n_tiles), 16)
    NP_pad = n_tiles * TP
    if NP_pad > NP:
        patches = jnp.pad(patches, ((0, NP_pad - NP), (0, 0)))

    # ---- VMEM budget from the hardware, ~30% headroom ------------------------
    try:
        vmem_cap = int(pltpu.get_tpu_info().vmem_capacity_bytes)
    except Exception:
        vmem_cap = 64 << 20
    lanes_k = _round_up(K, 128)
    lanes_c = _round_up(Cout, 128)
    need = 2 * (_round_up(TP, 16) * lanes_k * 2       # patches (bf16), double-buffered
                + _round_up(TP, 8) * lanes_c * 4      # output (f32)
                + _round_up(K, 16) * lanes_c * 2      # weight (bf16)
                + 8 * lanes_c * 4)                    # shift  (f32)
    vmem_limit = int(min(max(4 * need, 16 << 20), (vmem_cap * 7) // 10))

    out = pl.pallas_call(
        _matmul_bn_kernel,
        out_shape=jax.ShapeDtypeStruct((NP_pad, Cout), jnp.float32),
        grid=(n_tiles,),
        in_specs=[
            pl.BlockSpec((TP, K), lambda t: (t, 0)),
            pl.BlockSpec((K, Cout), lambda t: (0, 0)),
            pl.BlockSpec((1, Cout), lambda t: (0, 0)),
        ],
        out_specs=pl.BlockSpec((TP, Cout), lambda t: (t, 0)),
        compiler_params=pltpu.CompilerParams(
            dimension_semantics=("parallel",),
            vmem_limit_bytes=vmem_limit),
    )(patches, w2d, shift)

    out = out[:NP].reshape(N, Ho, Wo, Cout)
    # TODO(synk): return NHWC directly if downstream allows; the transpose below
    # is one extra HBM pass over the (real-Cout) output kept only for the NCHW
    # module contract.
    return jnp.transpose(out, (0, 3, 1, 2))


def _reference(x, conv_w, gamma, beta, running_mean, running_var, stride, eps=1e-5):
    y = lax.conv_general_dilated(
        x, conv_w, window_strides=(stride, stride),
        padding=((1, 1), (1, 1)),
        dimension_numbers=("NCHW", "OIHW", "NCHW"))
    s = (gamma / jnp.sqrt(running_var + eps)).reshape(1, -1, 1, 1)
    b = (beta - running_mean * gamma / jnp.sqrt(running_var + eps)).reshape(1, -1, 1, 1)
    return y * s + b


if __name__ == "__main__":
    key = jax.random.PRNGKey(0)
    k_x, k_w, k_g, k_b, k_m, k_v = jax.random.split(key, 6)

    N, Cin, H, W = 2, 4, 16, 16
    Cout, stride = 8, 2

    x = jax.random.normal(k_x, (N, Cin, H, W), dtype=jnp.float32)
    conv_w = jax.random.normal(k_w, (Cout, Cin, 3, 3), dtype=jnp.float32) * 0.1
    gamma = jax.random.normal(k_g, (Cout,), dtype=jnp.float32) * 0.1 + 1.0
    beta = jax.random.normal(k_b, (Cout,), dtype=jnp.float32) * 0.1
    running_mean = jax.random.normal(k_m, (Cout,), dtype=jnp.float32) * 0.1
    running_var = jax.random.uniform(k_v, (Cout,), dtype=jnp.float32,
                                     minval=0.5, maxval=1.5)

    out = firstconv3x3_forward(x, conv_w, gamma, beta, running_mean,
                               running_var, stride)
    out = jax.block_until_ready(out)

    ref = _reference(x, conv_w, gamma, beta, running_mean, running_var, stride)
    assert out.shape == (N, Cout, 8, 8), out.shape
    # bf16 inputs / weights with f32 accumulation -> loosened tolerance.
    assert jnp.allclose(out, ref, atol=5e-2, rtol=5e-2), float(
        jnp.max(jnp.abs(out - ref)))

    print("KERNEL_OK")
</pallas_src>

<mosaic_0001>
module attributes {stable_mosaic.version = 11 : i64} {
  func.func @_matmul_bn_kernel(%arg0: i32, %arg1: memref<128x36xbf16, #tpu.memory_space<vmem>>, %arg2: memref<36x8xbf16, #tpu.memory_space<vmem>>, %arg3: memref<1x8xf32, #tpu.memory_space<vmem>>, %arg4: memref<128x8xf32, #tpu.memory_space<vmem>>) attributes {dimension_semantics = [#tpu.dimension_semantics<parallel>], iteration_bounds = array<i64: 1>, scalar_prefetch = 0 : i64, scratch_operands = 0 : i64, tpu.core_type = #tpu.core_type<tc>, window_params = [{transform_indices = @transform_0, window_bounds = array<i64: 128, 36>}, {pipeline_mode = #tpu.pipeline_mode<synchronous>, transform_indices = @transform_1, window_bounds = array<i64: 36, 8>}, {pipeline_mode = #tpu.pipeline_mode<synchronous>, transform_indices = @transform_2, window_bounds = array<i64: 1, 8>}, {transform_indices = @transform_3, window_bounds = array<i64: 128, 8>}]} {
    %c0 = arith.constant 0 : index
    %c0_0 = arith.constant 0 : index
    %0 = vector.load %arg1[%c0, %c0_0] : memref<128x36xbf16, #tpu.memory_space<vmem>>, vector<128x36xbf16>
    %c0_1 = arith.constant 0 : index
    %c0_2 = arith.constant 0 : index
    %1 = vector.load %arg2[%c0_1, %c0_2] : memref<36x8xbf16, #tpu.memory_space<vmem>>, vector<36x8xbf16>
    %cst = arith.constant dense<0.000000e+00> : vector<128x8xf32>
    %2 = tpu.matmul %0, %1, %cst {dimension_numbers = #tpu.dot_dimension_numbers<[1], [0], [0], [1], [0, 0, 1, 1], [], []>} : vector<128x36xbf16>, vector<36x8xbf16>, vector<128x8xf32> -> vector<128x8xf32>
    %c0_3 = arith.constant 0 : index
    %c0_4 = arith.constant 0 : index
    %3 = vector.load %arg3[%c0_3, %c0_4] : memref<1x8xf32, #tpu.memory_space<vmem>>, vector<1x8xf32>
    %4 = vector.broadcast %3 : vector<1x8xf32> to vector<128x8xf32>
    %5 = arith.addf %2, %4 : vector<128x8xf32>
    %c0_5 = arith.constant 0 : index
    %c0_6 = arith.constant 0 : index
    %6 = vector.load %arg4[%c0_5, %c0_6] : memref<128x8xf32, #tpu.memory_space<vmem>>, vector<128x8xf32>
    tpu.vector_store %arg4[%c0_5, %c0_6], %5 {strides = array<i32>} : memref<128x8xf32, #tpu.memory_space<vmem>>, vector<128x8xf32>,
    return
  }
  func.func @transform_0(%arg0: i32) -> (i32, i32) {
    %c0_i32 = arith.constant 0 : i32
    %c0_i32_0 = arith.constant 0 : i32
    return %arg0, %c0_i32 : i32, i32
  }
  func.func @transform_1(%arg0: i32) -> (i32, i32) {
    %c0_i32 = arith.constant 0 : i32
    %c0_i32_0 = arith.constant 0 : i32
    %c0_i32_1 = arith.constant 0 : i32
    return %c0_i32, %c0_i32_0 : i32, i32
  }
  func.func @transform_2(%arg0: i32) -> (i32, i32) {
    %c0_i32 = arith.constant 0 : i32
    %c0_i32_0 = arith.constant 0 : i32
    %c0_i32_1 = arith.constant 0 : i32
    return %c0_i32, %c0_i32_0 : i32, i32
  }
  func.func @transform_3(%arg0: i32) -> (i32, i32) {
    %c0_i32 = arith.constant 0 : i32
    %c0_i32_0 = arith.constant 0 : i32
    return %arg0, %c0_i32 : i32, i32
  }
}

</mosaic_0001>

<llo_original>
// kernel: tpu_custom_call.1
$region0: #{tpu_custom_call.1}
  #allocation0 [shape = 'u32[]', space=smem, size = 0x4, offset = 0x4, fixed_abs, tag = 'smem constant byte address 0x4 - core index']
  #allocation1 [shape = 'u32[144,128]{1,0:T(1,128)}', space=vmem, size = 0x12000, scoped, tag = 'internal scratch']
  %s0 = inlined_call_operand.vmem [shape: bf16[128,36], index: 0, kind: input, shape index: {}]
  %s1 = inlined_call_operand.vmem [shape: bf16[36,8], index: 1, kind: input, shape index: {}]
  %s2 = inlined_call_operand.vmem [shape: f32[1,8], index: 2, kind: input, shape index: {}]
  %s3 = inlined_call_operand.vmem [shape: f32[128,8], index: 3, kind: output, shape index: {}]
  %s4 = sld [smem:[#allocation0]]
  $region22: #{tpu_custom_call.1} parent=0
    _
  %s6 = ssub.s32 1, %s4
  %s7 = scalar_select 0, %s6, %s4
  // Predicated region
  $region2: #{tpu_custom_call.1} parent=0 // pred_check
    _
  $region3: #{tpu_custom_call.1} parent=0 // pred_check_branch
    %9 = sbr.rel (0) target = $region5
  $region4: #{tpu_custom_call.1} parent=0 // pred_region
    _
  $region5: #{tpu_custom_call.1} parent=0 // pred_fallthru
    _
  // Predicated region
  $region6: #{tpu_custom_call.1} parent=0 // pred_check
    _
  $region7: #{tpu_custom_call.1} parent=0 // pred_check_branch
    %11 = sbr.rel (0) target = $region9
  $region8: #{tpu_custom_call.1} parent=0 // pred_region
    _
  $region9: #{tpu_custom_call.1} parent=0 // pred_fallthru
    _
  // Predicated region
  $region10: #{tpu_custom_call.1} parent=0 // pred_check
    _
  $region11: #{tpu_custom_call.1} parent=0 // pred_check_branch
    %13 = sbr.rel (0) target = $region13
  $region12: #{tpu_custom_call.1} parent=0 // pred_region
    _
  $region13: #{tpu_custom_call.1} parent=0 // pred_fallthru
    _
  %v15 = vld [vmem:[%s0] sm:$0xf]
  %v16 = vld [vmem:[%s0 + $0x4] sm:$0xf]
  %v17 = vld [vmem:[%s0 + $0x8] sm:$0xf]
  %v18 = vld [vmem:[%s0 + $0xc] sm:$0xf]
  %v19 = vld [vmem:[%s0 + $0x10] sm:$0xf]
  %v20 = vld [vmem:[%s0 + $0x14] sm:$0xf]
  %v21 = vld [vmem:[%s0 + $0x18] sm:$0xf]
  %v22 = vld [vmem:[%s0 + $0x1c] sm:$0xf]
  %v23 = vld [vmem:[%s0 + $0x20] sm:$0xf]
  %v24 = vld [vmem:[%s0 + $0x24] sm:$0xf]
  %v25 = vld [vmem:[%s0 + $0x28] sm:$0xf]
  %v26 = vld [vmem:[%s0 + $0x2c] sm:$0xf]
  %v27 = vld [vmem:[%s0 + $0x30] sm:$0xf]
  %v28 = vld [vmem:[%s0 + $0x34] sm:$0xf]
  %v29 = vld [vmem:[%s0 + $0x38] sm:$0xf]
  %v30 = vld [vmem:[%s0 + $0x3c] sm:$0xf]
  %v31 = vld [vmem:[%s1] sm:$0xf]
  %v32 = vld [vmem:[%s1 + $0x4] sm:$0xf]
  %v33 = vld [vmem:[%s1 + $0x8] sm:$0xf]
  %v34 = vld [vmem:[%s1 + $0xc] sm:$0xf]
  %v35 = vld [vmem:[%s1 + $0x10] sm:$0x3]
  %v36 = vld [vmem:[%s2] sm:$0x1]
  %v38 = vlaneseq
  %v39 = vshrl.u32 %v38, 7
  %v40 = vsub.s32 0, %v39
  %v41 = vrot.slane %v36, %v40
  %v59 = vunpack.c.l.b16 %v15
  %v60 = vunpack.c.l.b16 %v16
  %v61 = vunpack.c.l.b16 %v17
  %v62 = vunpack.c.l.b16 %v18
  %v63 = vunpack.c.l.b16 %v19
  %v64 = vunpack.c.l.b16 %v20
  %v65 = vunpack.c.l.b16 %v21
  %v66 = vunpack.c.l.b16 %v22
  %v67 = vunpack.c.l.b16 %v23
  %v68 = vunpack.c.l.b16 %v24
  %v69 = vunpack.c.l.b16 %v25
  %v70 = vunpack.c.l.b16 %v26
  %v71 = vunpack.c.l.b16 %v27
  %v72 = vunpack.c.l.b16 %v28
  %v73 = vunpack.c.l.b16 %v29
  %v74 = vunpack.c.l.b16 %v30
  %v75 = vpack.c.b16 %v60, %v59
  %v76 = vpack.c.b16 %v62, %v61
  %v77 = vpack.c.b16 %v64, %v63
  %v78 = vpack.c.b16 %v66, %v65
  %v79 = vpack.c.b16 %v68, %v67
  %v80 = vpack.c.b16 %v70, %v69
  %v81 = vpack.c.b16 %v72, %v71
  %v82 = vpack.c.b16 %v74, %v73
  %v88 = vunpack.c.l.b16 %v31
  %v89 = vunpack.c.l.b16 %v32
  %v90 = vunpack.c.l.b16 %v33
  %v91 = vunpack.c.l.b16 %v34
  %v92 = vunpack.c.l.b16 %v35
  %v93 = vpack.c.b16 %v89, %v88
  %v94 = vpack.c.b16 %v91, %v90
  %v95 = vpack.c.b16 %v92, %v92
  %vm98 = vcmask 293888
  %v100 = vsel %vm98, %v75, 0
  %v103 = vsel %vm98, %v76, 0
  %v106 = vsel %vm98, %v77, 0
  %v109 = vsel %vm98, %v78, 0
  %v112 = vsel %vm98, %v79, 0
  %v115 = vsel %vm98, %v80, 0
  %v118 = vsel %vm98, %v81, 0
  %v121 = vsel %vm98, %v82, 0
  %vm123 = vcmask 1041408
  %v125 = vsel %vm123, %v95, 0
  %127 = vmatprep.subr.bf16.mxu0 0
  %128 = vmatpush1.bf16.msra.mxu0 0
  %129 = vmatprep.subr.bf16.mxu0 0
  %130 = vmatpush1.bf16.msra.mxu0 0
  %131 = vmatprep.subr.bf16.mxu0 0
  %132 = vmatpush1.bf16.msra.mxu0 0
  %133 = vmatprep.subr.bf16.mxu0 0
  %134 = vmatpush1.bf16.msra.mxu0 0
  %135 = vmatprep.subr.bf16.mxu0 0
  %136 = vmatpush1.bf16.msra.mxu0 0
  %137 = vmatprep.subr.bf16.mxu0 0
  %138 = vmatpush1.bf16.msra.mxu0 %v125
  %139 = vmatprep.subr.bf16.mxu0 0
  %140 = vmatpush1.bf16.msra.mxu0 %v94
  %141 = vmatprep.subr.bf16.mxu0 0
  %142 = vmatpush1.bf16.msra.mxu0 %v93
  %143 = vmatprep.subr.bf16.mxu0 0
  %144 = vmatpush2.bf16.msra.mxu0 0
  %145 = vmatprep.subr.bf16.mxu0 0
  %146 = vmatpush2.bf16.msra.mxu0 0
  %147 = vmatprep.subr.bf16.mxu0 0
  %148 = vmatpush2.bf16.msra.mxu0 0
  %149 = vmatprep.subr.bf16.mxu0 0
  %150 = vmatpush2.bf16.msra.mxu0 0
  %151 = vmatprep.subr.bf16.mxu0 0
  %152 = vmatpush2.bf16.msra.mxu0 0
  %153 = vmatprep.subr.bf16.mxu0 0
  %154 = vmatpush2.bf16.msra.mxu0 0
  %155 = vmatprep.subr.bf16.mxu0 0
  %156 = vmatpush2.bf16.msra.mxu0 0
  %157 = vmatprep.subr.bf16.mxu0 0
  %158 = vmatpush2.bf16.msra.mxu0 0
  %159 = vmatprep.mubr.bf16.mxu0 0
  %160 = vmatmul.mubr.bf16.gmra.mxu0 %v100
  %v161 = vpop.f32.mrf.mxu0
  %v162 = vadd.f32 %v41, %v161
  %v163 = vpop.f32.mrf.mxu0
  %v164 = vpop.f32.mrf.mxu0
  %v165 = vadd.f32 %v41, %v164
  %v166 = vpop.f32.mrf.mxu0
  %167 = vmatprep.mubr.bf16.mxu0 0
  %168 = vmatmul.mubr.bf16.gmra.mxu0 %v103
  %v169 = vpop.f32.mrf.mxu0
  %v170 = vadd.f32 %v41, %v169
  %v171 = vpop.f32.mrf.mxu0
  %v172 = vpop.f32.mrf.mxu0
  %v173 = vadd.f32 %v41, %v172
  %v174 = vpop.f32.mrf.mxu0
  %175 = vmatprep.mubr.bf16.mxu0 0
  %176 = vmatmul.mubr.bf16.gmra.mxu0 %v106
  %v177 = vpop.f32.mrf.mxu0
  %v178 = vadd.f32 %v41, %v177
  %v179 = vpop.f32.mrf.mxu0
  %v180 = vpop.f32.mrf.mxu0
  %v181 = vadd.f32 %v41, %v180
  %v182 = vpop.f32.mrf.mxu0
  %183 = vmatprep.mubr.bf16.mxu0 0
  %184 = vmatmul.mubr.bf16.gmra.mxu0 %v109
  %v185 = vpop.f32.mrf.mxu0
  %v186 = vadd.f32 %v41, %v185
  %v187 = vpop.f32.mrf.mxu0
  %v188 = vpop.f32.mrf.mxu0
  %v189 = vadd.f32 %v41, %v188
  %v190 = vpop.f32.mrf.mxu0
  %191 = vmatprep.mubr.bf16.mxu0 0
  %192 = vmatmul.mubr.bf16.gmra.mxu0 %v112
  %v193 = vpop.f32.mrf.mxu0
  %v194 = vadd.f32 %v41, %v193
  %v195 = vpop.f32.mrf.mxu0
  %v196 = vpop.f32.mrf.mxu0
  %v197 = vadd.f32 %v41, %v196
  %v198 = vpop.f32.mrf.mxu0
  %199 = vmatprep.mubr.bf16.mxu0 0
  %200 = vmatmul.mubr.bf16.gmra.mxu0 %v115
  %v201 = vpop.f32.mrf.mxu0
  %v202 = vadd.f32 %v41, %v201
  %v203 = vpop.f32.mrf.mxu0
  %v204 = vpop.f32.mrf.mxu0
  %v205 = vadd.f32 %v41, %v204
  %v206 = vpop.f32.mrf.mxu0
  %207 = vmatprep.mubr.bf16.mxu0 0
  %208 = vmatmul.mubr.bf16.gmra.mxu0 %v118
  %v209 = vpop.f32.mrf.mxu0
  %v210 = vadd.f32 %v41, %v209
  %v211 = vpop.f32.mrf.mxu0
  %v212 = vpop.f32.mrf.mxu0
  %v213 = vadd.f32 %v41, %v212
  %v214 = vpop.f32.mrf.mxu0
  %215 = vmatprep.mubr.bf16.mxu0 0
  %216 = vmatmul.mubr.bf16.gmra.mxu0 %v121
  %v217 = vpop.f32.mrf.mxu0
  %v218 = vadd.f32 %v41, %v217
  %v219 = vpop.f32.mrf.mxu0
  %v220 = vpop.f32.mrf.mxu0
  %v221 = vadd.f32 %v41, %v220
  %v222 = vpop.f32.mrf.mxu0
  %223 = vdwg.mxu0
  %vm224 = vcmask 64512
  %225 = vst.msk [vmem:[%s3] sm:$0xff] %vm224, %v162
  %226 = vst.msk [vmem:[%s3 + $0x8] sm:$0xff] %vm224, %v165
  %227 = vst.msk [vmem:[%s3 + $0x10] sm:$0xff] %vm224, %v170
  %228 = vst.msk [vmem:[%s3 + $0x18] sm:$0xff] %vm224, %v173
  %229 = vst.msk [vmem:[%s3 + $0x20] sm:$0xff] %vm224, %v178
  %230 = vst.msk [vmem:[%s3 + $0x28] sm:$0xff] %vm224, %v181
  %231 = vst.msk [vmem:[%s3 + $0x30] sm:$0xff] %vm224, %v186
  %232 = vst.msk [vmem:[%s3 + $0x38] sm:$0xff] %vm224, %v189
  %233 = vst.msk [vmem:[%s3 + $0x40] sm:$0xff] %vm224, %v194
  %234 = vst.msk [vmem:[%s3 + $0x48] sm:$0xff] %vm224, %v197
  %235 = vst.msk [vmem:[%s3 + $0x50] sm:$0xff] %vm224, %v202
  %236 = vst.msk [vmem:[%s3 + $0x58] sm:$0xff] %vm224, %v205
  %237 = vst.msk [vmem:[%s3 + $0x60] sm:$0xff] %vm224, %v210
  %238 = vst.msk [vmem:[%s3 + $0x68] sm:$0xff] %vm224, %v213
  %239 = vst.msk [vmem:[%s3 + $0x70] sm:$0xff] %vm224, %v218
  %240 = vst.msk [vmem:[%s3 + $0x78] sm:$0xff] %vm224, %v221
  // Predicated region
  $region14: #{tpu_custom_call.1} parent=0 // pred_check
    _
  $region15: #{tpu_custom_call.1} parent=0 // pred_check_branch
    %242 = sbr.rel (0) target = $region17
  $region16: #{tpu_custom_call.1} parent=0 // pred_region
    _
  $region17: #{tpu_custom_call.1} parent=0 // pred_fallthru
    _
  // Predicated region
  $region18: #{tpu_custom_call.1} parent=0 // pred_check
    _
  $region19: #{tpu_custom_call.1} parent=0 // pred_check_branch
    %244 = sbr.rel (0) target = $region21
  $region20: #{tpu_custom_call.1} parent=0 // pred_region
    _
  $region21: #{tpu_custom_call.1} parent=0 // pred_fallthru
    _

</llo_original>
